<compile_context>
chip_gen: v5e
topology: v5e:2x2
jax: 0.10.0
libtpu: 0.0.40
codegen_flags: <defaults>
</compile_context>

<pallas_src>
import functools
import math

import numpy as np
import jax
import jax.numpy as jnp
from jax.experimental import pallas as pl
from jax.experimental.pallas import tpu as pltpu


def _ensemble_kernel(w_ref, b_ref, x_ref, rh_ref, rwt_ref, out_ref, logits_ref,
                     *, ct, cin, h, w, matmul_dtype, identity_first):
    # w_ref:      (Cout, Cin)       SMEM  -- 1x1-conv ("model") weight
    # b_ref:      (Cout,)           SMEM  -- 1x1-conv bias
    # x_ref:      (1, Cin*Hp, Wp)   VMEM  -- padded full-res input (NCHW, C and H merged)
    # rh_ref:     (1, Hp, Hp)       VMEM  -- this scale: bilinear-up o nearest-down (height)
    # rwt_ref:    (1, Wp, Wp)       VMEM  -- this scale: transposed width resize matrix
    # out_ref:    (1, ct*Hp, Wp)    VMEM  -- running max, resident across the scale axis
    # logits_ref: (ct*Hp, Wp)       VMEM scratch (matmul_dtype) -- conv output for this tile
    s = pl.program_id(2)
    c0 = pl.program_id(1) * ct          # first global output channel of this channel tile

    # ---- 1x1-conv "model" at FULL resolution, once per (batch, channel-tile).
    #      ci-outer: each input slice loaded once; f32 accumulation on the VPU; single cast
    #      to the MXU-feed dtype when writing the scratch.
    @pl.when(s == 0)
    def _conv():
        accs = [None] * ct
        for ci in range(cin):
            xi = x_ref[0, ci * h:(ci + 1) * h, :]                 # (Hp, Wp) f32, loaded once
            for co in range(ct):
                term = w_ref[c0 + co, ci] * xi
                accs[co] = term if accs[co] is None else accs[co] + term
        for co in range(ct):
            logits_ref[co * h:(co + 1) * h, :] = (
                accs[co] + b_ref[c0 + co]).astype(matmul_dtype)

    # ---- per-channel separable resize fused with the running max: no (ct*Hp, Wp)
    #      intermediates are ever materialized (no ups list / concatenate / full-width t).
    def _resize_and_combine(first):
        rwt = rwt_ref[0]                                          # (Wp, Wp) matmul_dtype
        rh = rh_ref[0]                                            # (Hp, Hp) matmul_dtype
        for co in range(ct):
            rows = slice(co * h, (co + 1) * h)
            t_co = jnp.dot(logits_ref[rows, :], rwt,
                           preferred_element_type=matmul_dtype)   # width pass  (Hp, Wp)
            up = jnp.dot(rh, t_co,
                         preferred_element_type=jnp.float32)      # height pass (Hp, Wp) f32
            if first:
                out_ref[0, rows, :] = up
            else:
                out_ref[0, rows, :] = jnp.maximum(out_ref[0, rows, :], up)

    if identity_first:
        # scale == 1.0 runs first: resize is the identity, so s==0 just copies the logits
        # into the max accumulator and statically skips both MXU matmuls.
        @pl.when(s == 0)
        def _init():
            for co in range(ct):
                rows = slice(co * h, (co + 1) * h)
                out_ref[0, rows, :] = logits_ref[rows, :].astype(jnp.float32)

        @pl.when(s > 0)
        def _rest():
            _resize_and_combine(first=False)
    else:
        @pl.when(s == 0)
        def _init():
            _resize_and_combine(first=True)

        @pl.when(s > 0)
        def _rest():
            _resize_and_combine(first=False)


def _bilinear_matrix_1d(out_size: int, in_size: int) -> np.ndarray:
    # PyTorch F.interpolate(mode='bilinear', align_corners=False) source-index rule.
    A = np.zeros((out_size, in_size), dtype=np.float32)
    if in_size == 1:
        A[:, 0] = 1.0
        return A
    ratio = in_size / out_size
    for d in range(out_size):
        src = max((d + 0.5) * ratio - 0.5, 0.0)
        i0 = min(int(np.floor(src)), in_size - 1)
        i1 = min(i0 + 1, in_size - 1)
        frac = src - float(i0)
        A[d, i0] += 1.0 - frac
        A[d, i1] += frac
    return A


def _nearest_matrix_1d(out_size: int, in_size: int, scale: float) -> np.ndarray:
    # PyTorch F.interpolate(mode='nearest', scale_factor=scale, recompute_scale_factor=False):
    # src = floor(dst / scale), clamped.  (Older recompute_scale_factor=True PyTorch can
    # differ by one pixel for non-reciprocal scales.)
    idx = np.minimum(np.floor(np.arange(out_size) / scale).astype(np.int64), in_size - 1)
    Nsel = np.zeros((out_size, in_size), dtype=np.float32)
    Nsel[np.arange(out_size), idx] = 1.0
    return Nsel


def segmentation_scalelist(x_org, conv_w, conv_b, scales, *,
                           matmul_dtype=jnp.bfloat16, cout_tile=None):
    """x_org: (N, Cin, H, W) NCHW; conv_w: (Cout, Cin, 1, 1); conv_b: (Cout,).
    Returns (N, Cout, H, W) = max over scales of bilinear-upsampled model(nearest(x))."""
    N, Cin, H, W = x_org.shape
    assert H == W, "module bilinear-upsamples to size=[W, W]; square inputs assumed"
    Cout = conv_w.shape[0]

    # Order scales so an identity scale (1.0) runs first (max is commutative); its resize
    # is then skipped statically inside the kernel.
    scales = list(scales)
    identity_first = False
    for i, sc in enumerate(scales):
        if abs(float(sc) - 1.0) < 1e-12:
            scales = [scales[i]] + scales[:i] + scales[i + 1:]
            identity_first = True
            break
    S = len(scales)

    # Channel-tile grid axis: bounds the resident out block + logits scratch at large Cout
    # (v7x 64 MiB VMEM) and provides a parallel axis for megacore sharding.
    if cout_tile is None or cout_tile <= 0 or Cout % cout_tile != 0:
        cout_tile = Cout
    ct = cout_tile
    n_ctiles = Cout // ct

    # Lane/sublane-friendly padding: H -> multiple of 8, W -> multiple of 128 (unmasked
    # lane-dense stores, clean (8,128) tiles, full MXU).  Padded region is sliced off.
    Hp = -(-H // 8) * 8
    Wp = -(-W // 128) * 128

    # Per-scale combined resize matrices (nearest-down then bilinear-up), host precompute,
    # zero-embedded in the padded sizes and pre-cast to the MXU-feed dtype.
    rh_list, rwt_list = [], []
    for scale in scales:
        Hs = int(math.floor(H * scale))
        Ws = int(math.floor(W * scale))
        Rh = _bilinear_matrix_1d(H, Hs) @ _nearest_matrix_1d(Hs, H, scale)   # (H, H)
        Rw = _bilinear_matrix_1d(W, Ws) @ _nearest_matrix_1d(Ws, W, scale)   # (W, W)
        Rh_p = np.zeros((Hp, Hp), np.float32)
        Rh_p[:H, :H] = Rh
        RwT_p = np.zeros((Wp, Wp), np.float32)
        RwT_p[:W, :W] = Rw.T
        rh_list.append(Rh_p)
        rwt_list.append(RwT_p)
    rh_all = jnp.asarray(np.stack(rh_list), dtype=matmul_dtype)    # (S, Hp, Hp)
    rwt_all = jnp.asarray(np.stack(rwt_list), dtype=matmul_dtype)  # (S, Wp, Wp)

    w_mat = conv_w.reshape(Cout, Cin).astype(jnp.float32)
    b_vec = conv_b.reshape(Cout).astype(jnp.float32)
    x_pad = jnp.pad(x_org.astype(jnp.float32),
                    ((0, 0), (0, 0), (0, Hp - H), (0, Wp - W)))
    x_rows = x_pad.reshape(N, Cin * Hp, Wp)    # stays NCHW-ordered, no transposes

    # Generation-aware VMEM budget (v5e/v6e ~128 MiB physical, v7x 64 MiB).
    rb = jnp.dtype(matmul_dtype).itemsize
    need = (4 * 2 * Cin * Hp * Wp            # input block, double-buffered, f32
            + rb * 2 * (Hp * Hp + Wp * Wp)   # per-scale resize blocks, double-buffered
            + 4 * 2 * ct * Hp * Wp           # resident output block, double-buffered, f32
            + rb * ct * Hp * Wp)             # logits scratch
    try:
        vmem_cap = int(pltpu.get_tpu_info().vmem_capacity_bytes)
    except Exception:
        vmem_cap = 128 * 1024 * 1024
    vmem_limit = int(min(0.85 * vmem_cap, max(1.5 * need, 16 * 1024 * 1024)))

    kernel = functools.partial(_ensemble_kernel, ct=ct, cin=Cin, h=Hp, w=Wp,
                               matmul_dtype=matmul_dtype, identity_first=identity_first)

    out = pl.pallas_call(
        kernel,
        out_shape=jax.ShapeDtypeStruct((N, Cout * Hp, Wp), jnp.float32),
        grid_spec=pltpu.PrefetchScalarGridSpec(
            num_scalar_prefetch=0,
            grid=(N, n_ctiles, S),
            in_specs=[
                pl.BlockSpec(memory_space=pltpu.MemorySpace.SMEM),           # conv weight
                pl.BlockSpec(memory_space=pltpu.MemorySpace.SMEM),           # conv bias
                pl.BlockSpec((1, Cin * Hp, Wp), lambda n, c, s: (n, 0, 0)),  # input
                pl.BlockSpec((1, Hp, Hp), lambda n, c, s: (s, 0, 0)),        # Rh (per scale)
                pl.BlockSpec((1, Wp, Wp), lambda n, c, s: (s, 0, 0)),        # Rw^T (per scale)
            ],
            out_specs=pl.BlockSpec((1, ct * Hp, Wp), lambda n, c, s: (n, c, 0)),
            scratch_shapes=[pltpu.VMEM((ct * Hp, Wp), matmul_dtype)],
        ),
        compiler_params=pltpu.CompilerParams(
            dimension_semantics=("parallel", "parallel", "arbitrary"),
            vmem_limit_bytes=vmem_limit,
        ),
    )(w_mat, b_vec, x_rows, rh_all, rwt_all)

    return out.reshape(N, Cout, Hp, Wp)[:, :, :H, :W]


if __name__ == "__main__":
    key = jax.random.PRNGKey(0)
    k1, k2, k3 = jax.random.split(key, 3)

    N, Cin, H, W = 2, 4, 16, 16
    Cout = 3                        # number of segmentation classes
    scales = [0.5, 1.0, 2.0]

    x = jax.random.normal(k1, (N, Cin, H, W), dtype=jnp.float32)
    # deterministic synthetic "model": 1x1 conv segmentation head
    conv_w = 0.1 * jax.random.normal(k2, (Cout, Cin, 1, 1), dtype=jnp.float32)
    conv_b = 0.1 * jax.random.normal(k3, (Cout,), dtype=jnp.float32)

    # Plain-JAX reference of the module semantics: nearest-down -> 1x1 conv ->
    # bilinear-up to (H, W) -> running max over scales.
    w2 = conv_w.reshape(Cout, Cin)
    ref = None
    for scale in scales:
        Hs = int(math.floor(H * scale))
        Ws = int(math.floor(W * scale))
        idx_h = np.minimum(np.floor(np.arange(Hs) / scale).astype(np.int32), H - 1)
        idx_w = np.minimum(np.floor(np.arange(Ws) / scale).astype(np.int32), W - 1)
        x_s = x[:, :, idx_h, :][:, :, :, idx_w]                      # nearest downsample
        logit = jnp.einsum('oc,nchw->nohw', w2, x_s) + conv_b[None, :, None, None]
        Ah = jnp.asarray(_bilinear_matrix_1d(H, Hs))
        Aw = jnp.asarray(_bilinear_matrix_1d(W, Ws))
        up = jnp.einsum('Hh,nohw,Ww->noHW', Ah, logit, Aw)           # bilinear upsample
        ref = up if ref is None else jnp.maximum(ref, up)
    ref = np.asarray(ref)

    # Exact-semantics path: f32 MXU feed, single channel tile.
    out_f32 = jax.block_until_ready(
        segmentation_scalelist(x, conv_w, conv_b, scales, matmul_dtype=jnp.float32))
    assert out_f32.shape == (N, Cout, H, W), out_f32.shape
    np.testing.assert_allclose(np.asarray(out_f32), ref, atol=1e-4, rtol=1e-4)

    # Default fast path: bf16 MXU feed; channel-tile grid axis exercised (cout_tile=1).
    out_fast = jax.block_until_ready(
        segmentation_scalelist(x, conv_w, conv_b, scales, cout_tile=1))
    assert out_fast.shape == (N, Cout, H, W), out_fast.shape
    assert bool(jnp.all(jnp.isfinite(out_fast)))
    np.testing.assert_allclose(np.asarray(out_fast), ref, atol=5e-2, rtol=5e-2)

    print("KERNEL_OK")
</pallas_src>

<mosaic_0001>
module attributes {stable_mosaic.version = 11 : i64} {
  func.func @_ensemble_kernel(%arg0: i32, %arg1: i32, %arg2: i32, %arg3: memref<3x4xf32, #tpu.memory_space<smem>>, %arg4: memref<3xf32, #tpu.memory_space<smem>>, %arg5: memref<1x64x128xf32, #tpu.memory_space<vmem>>, %arg6: memref<1x16x16xf32, #tpu.memory_space<vmem>>, %arg7: memref<1x128x128xf32, #tpu.memory_space<vmem>>, %arg8: memref<1x48x128xf32, #tpu.memory_space<vmem>>, %arg9: memref<48x128xf32, #tpu.memory_space<vmem>>) attributes {dimension_semantics = [#tpu.dimension_semantics<parallel>, #tpu.dimension_semantics<parallel>, #tpu.dimension_semantics<arbitrary>], iteration_bounds = array<i64: 2, 1, 3>, scalar_prefetch = 0 : i64, scratch_operands = 1 : i64, tpu.core_type = #tpu.core_type<tc>, window_params = [{transform_indices = @transform_0, window_bounds = array<i64: 3, 4>}, {transform_indices = @transform_1, window_bounds = array<i64: 3>}, {transform_indices = @transform_2, window_bounds = array<i64: 1, 64, 128>}, {transform_indices = @transform_3, window_bounds = array<i64: 1, 16, 16>}, {transform_indices = @transform_4, window_bounds = array<i64: 1, 128, 128>}, {transform_indices = @transform_5, window_bounds = array<i64: 1, 48, 128>}]} {
    %c3_i32 = arith.constant 3 : i32
    %0 = arith.muli %arg1, %c3_i32 : i32
    %c0_i32 = arith.constant 0 : i32
    %1 = arith.cmpi eq, %arg2, %c0_i32 : i32
    %2 = arith.extui %1 : i1 to i32
    %c0_i32_0 = arith.constant 0 : i32
    %3 = arith.cmpi ne, %2, %c0_i32_0 : i32
    scf.if %3 {
      %c0 = arith.constant 0 : index
      %c0_5 = arith.constant 0 : index
      %c0_6 = arith.constant 0 : index
      %10 = vector.load %arg5[%c0, %c0_5, %c0_6] : memref<1x64x128xf32, #tpu.memory_space<vmem>>, vector<1x16x128xf32>
      %11 = vector.shape_cast %10 : vector<1x16x128xf32> to vector<16x128xf32>
      %c0_i32_7 = arith.constant 0 : i32
      %12 = arith.addi %0, %c0_i32_7 : i32
      %13 = arith.index_cast %12 : i32 to index
      %c0_8 = arith.constant 0 : index
      %14 = memref.load %arg3[%13, %c0_8] : memref<3x4xf32, #tpu.memory_space<smem>>
      %15 = vector.broadcast %14 : f32 to vector<16x128xf32>
      %16 = arith.mulf %15, %11 : vector<16x128xf32>
      %c1_i32 = arith.constant 1 : i32
      %17 = arith.addi %0, %c1_i32 : i32
      %18 = arith.index_cast %17 : i32 to index
      %c0_9 = arith.constant 0 : index
      %19 = memref.load %arg3[%18, %c0_9] : memref<3x4xf32, #tpu.memory_space<smem>>
      %20 = vector.broadcast %19 : f32 to vector<16x128xf32>
      %21 = arith.mulf %20, %11 : vector<16x128xf32>
      %c2_i32 = arith.constant 2 : i32
      %22 = arith.addi %0, %c2_i32 : i32
      %23 = arith.index_cast %22 : i32 to index
      %c0_10 = arith.constant 0 : index
      %24 = memref.load %arg3[%23, %c0_10] : memref<3x4xf32, #tpu.memory_space<smem>>
      %25 = vector.broadcast %24 : f32 to vector<16x128xf32>
      %26 = arith.mulf %25, %11 : vector<16x128xf32>
      %c0_11 = arith.constant 0 : index
      %c16 = arith.constant 16 : index
      %c0_12 = arith.constant 0 : index
      %27 = vector.load %arg5[%c0_11, %c16, %c0_12] : memref<1x64x128xf32, #tpu.memory_space<vmem>>, vector<1x16x128xf32>
      %28 = vector.shape_cast %27 : vector<1x16x128xf32> to vector<16x128xf32>
      %c0_i32_13 = arith.constant 0 : i32
      %29 = arith.addi %0, %c0_i32_13 : i32
      %30 = arith.index_cast %29 : i32 to index
      %c1 = arith.constant 1 : index
      %31 = memref.load %arg3[%30, %c1] : memref<3x4xf32, #tpu.memory_space<smem>>
      %32 = vector.broadcast %31 : f32 to vector<16x128xf32>
      %33 = arith.mulf %32, %28 : vector<16x128xf32>
      %34 = arith.addf %16, %33 : vector<16x128xf32>
      %c1_i32_14 = arith.constant 1 : i32
      %35 = arith.addi %0, %c1_i32_14 : i32
      %36 = arith.index_cast %35 : i32 to index
      %c1_15 = arith.constant 1 : index
      %37 = memref.load %arg3[%36, %c1_15] : memref<3x4xf32, #tpu.memory_space<smem>>
      %38 = vector.broadcast %37 : f32 to vector<16x128xf32>
      %39 = arith.mulf %38, %28 : vector<16x128xf32>
      %40 = arith.addf %21, %39 : vector<16x128xf32>
      %c2_i32_16 = arith.constant 2 : i32
      %41 = arith.addi %0, %c2_i32_16 : i32
      %42 = arith.index_cast %41 : i32 to index
      %c1_17 = arith.constant 1 : index
      %43 = memref.load %arg3[%42, %c1_17] : memref<3x4xf32, #tpu.memory_space<smem>>
      %44 = vector.broadcast %43 : f32 to vector<16x128xf32>
      %45 = arith.mulf %44, %28 : vector<16x128xf32>
      %46 = arith.addf %26, %45 : vector<16x128xf32>
      %c0_18 = arith.constant 0 : index
      %c32 = arith.constant 32 : index
      %c0_19 = arith.constant 0 : index
      %47 = vector.load %arg5[%c0_18, %c32, %c0_19] : memref<1x64x128xf32, #tpu.memory_space<vmem>>, vector<1x16x128xf32>
      %48 = vector.shape_cast %47 : vector<1x16x128xf32> to vector<16x128xf32>
      %c0_i32_20 = arith.constant 0 : i32
      %49 = arith.addi %0, %c0_i32_20 : i32
      %50 = arith.index_cast %49 : i32 to index
      %c2 = arith.constant 2 : index
      %51 = memref.load %arg3[%50, %c2] : memref<3x4xf32, #tpu.memory_space<smem>>
      %52 = vector.broadcast %51 : f32 to vector<16x128xf32>
      %53 = arith.mulf %52, %48 : vector<16x128xf32>
      %54 = arith.addf %34, %53 : vector<16x128xf32>
      %c1_i32_21 = arith.constant 1 : i32
      %55 = arith.addi %0, %c1_i32_21 : i32
      %56 = arith.index_cast %55 : i32 to index
      %c2_22 = arith.constant 2 : index
      %57 = memref.load %arg3[%56, %c2_22] : memref<3x4xf32, #tpu.memory_space<smem>>
      %58 = vector.broadcast %57 : f32 to vector<16x128xf32>
      %59 = arith.mulf %58, %48 : vector<16x128xf32>
      %60 = arith.addf %40, %59 : vector<16x128xf32>
      %c2_i32_23 = arith.constant 2 : i32
      %61 = arith.addi %0, %c2_i32_23 : i32
      %62 = arith.index_cast %61 : i32 to index
      %c2_24 = arith.constant 2 : index
      %63 = memref.load %arg3[%62, %c2_24] : memref<3x4xf32, #tpu.memory_space<smem>>
      %64 = vector.broadcast %63 : f32 to vector<16x128xf32>
      %65 = arith.mulf %64, %48 : vector<16x128xf32>
      %66 = arith.addf %46, %65 : vector<16x128xf32>
      %c0_25 = arith.constant 0 : index
      %c48 = arith.constant 48 : index
      %c0_26 = arith.constant 0 : index
      %67 = vector.load %arg5[%c0_25, %c48, %c0_26] : memref<1x64x128xf32, #tpu.memory_space<vmem>>, vector<1x16x128xf32>
      %68 = vector.shape_cast %67 : vector<1x16x128xf32> to vector<16x128xf32>
      %c0_i32_27 = arith.constant 0 : i32
      %69 = arith.addi %0, %c0_i32_27 : i32
      %70 = arith.index_cast %69 : i32 to index
      %c3 = arith.constant 3 : index
      %71 = memref.load %arg3[%70, %c3] : memref<3x4xf32, #tpu.memory_space<smem>>
      %72 = vector.broadcast %71 : f32 to vector<16x128xf32>
      %73 = arith.mulf %72, %68 : vector<16x128xf32>
      %74 = arith.addf %54, %73 : vector<16x128xf32>
      %c1_i32_28 = arith.constant 1 : i32
      %75 = arith.addi %0, %c1_i32_28 : i32
      %76 = arith.index_cast %75 : i32 to index
      %c3_29 = arith.constant 3 : index
      %77 = memref.load %arg3[%76, %c3_29] : memref<3x4xf32, #tpu.memory_space<smem>>
      %78 = vector.broadcast %77 : f32 to vector<16x128xf32>
      %79 = arith.mulf %78, %68 : vector<16x128xf32>
      %80 = arith.addf %60, %79 : vector<16x128xf32>
      %c2_i32_30 = arith.constant 2 : i32
      %81 = arith.addi %0, %c2_i32_30 : i32
      %82 = arith.index_cast %81 : i32 to index
      %c3_31 = arith.constant 3 : index
      %83 = memref.load %arg3[%82, %c3_31] : memref<3x4xf32, #tpu.memory_space<smem>>
      %84 = vector.broadcast %83 : f32 to vector<16x128xf32>
      %85 = arith.mulf %84, %68 : vector<16x128xf32>
      %86 = arith.addf %66, %85 : vector<16x128xf32>
      %c0_i32_32 = arith.constant 0 : i32
      %87 = arith.addi %0, %c0_i32_32 : i32
      %88 = arith.index_cast %87 : i32 to index
      %89 = memref.load %arg4[%88] : memref<3xf32, #tpu.memory_space<smem>>
      %90 = vector.broadcast %89 : f32 to vector<16x128xf32>
      %91 = arith.addf %74, %90 : vector<16x128xf32>
      %c0_33 = arith.constant 0 : index
      %c0_34 = arith.constant 0 : index
      %92 = vector.load %arg9[%c0_33, %c0_34] : memref<48x128xf32, #tpu.memory_space<vmem>>, vector<16x128xf32>
      tpu.vector_store %arg9[%c0_33, %c0_34], %91 {strides = array<i32>} : memref<48x128xf32, #tpu.memory_space<vmem>>, vector<16x128xf32>,
      %c1_i32_35 = arith.constant 1 : i32
      %93 = arith.addi %0, %c1_i32_35 : i32
      %94 = arith.index_cast %93 : i32 to index
      %95 = memref.load %arg4[%94] : memref<3xf32, #tpu.memory_space<smem>>
      %96 = vector.broadcast %95 : f32 to vector<16x128xf32>
      %97 = arith.addf %80, %96 : vector<16x128xf32>
      %c16_36 = arith.constant 16 : index
      %c0_37 = arith.constant 0 : index
      %98 = vector.load %arg9[%c16_36, %c0_37] : memref<48x128xf32, #tpu.memory_space<vmem>>, vector<16x128xf32>
      tpu.vector_store %arg9[%c16_36, %c0_37], %97 {strides = array<i32>} : memref<48x128xf32, #tpu.memory_space<vmem>>, vector<16x128xf32>,
      %c2_i32_38 = arith.constant 2 : i32
      %99 = arith.addi %0, %c2_i32_38 : i32
      %100 = arith.index_cast %99 : i32 to index
      %101 = memref.load %arg4[%100] : memref<3xf32, #tpu.memory_space<smem>>
      %102 = vector.broadcast %101 : f32 to vector<16x128xf32>
      %103 = arith.addf %86, %102 : vector<16x128xf32>
      %c32_39 = arith.constant 32 : index
      %c0_40 = arith.constant 0 : index
      %104 = vector.load %arg9[%c32_39, %c0_40] : memref<48x128xf32, #tpu.memory_space<vmem>>, vector<16x128xf32>
      tpu.vector_store %arg9[%c32_39, %c0_40], %103 {strides = array<i32>} : memref<48x128xf32, #tpu.memory_space<vmem>>, vector<16x128xf32>,
    } else {
    }
    %c0_i32_1 = arith.constant 0 : i32
    %4 = arith.cmpi eq, %arg2, %c0_i32_1 : i32
    %5 = arith.extui %4 : i1 to i32
    %c0_i32_2 = arith.constant 0 : i32
    %6 = arith.cmpi ne, %5, %c0_i32_2 : i32
    scf.if %6 {
      %c0 = arith.constant 0 : index
      %c0_5 = arith.constant 0 : index
      %10 = vector.load %arg9[%c0, %c0_5] : memref<48x128xf32, #tpu.memory_space<vmem>>, vector<16x128xf32>
      %c0_6 = arith.constant 0 : index
      %c0_7 = arith.constant 0 : index
      %c0_8 = arith.constant 0 : index
      %11 = vector.load %arg8[%c0_6, %c0_7, %c0_8] : memref<1x48x128xf32, #tpu.memory_space<vmem>>, vector<1x16x128xf32>
      %12 = vector.shape_cast %11 : vector<1x16x128xf32> to vector<16x128xf32>
      %13 = vector.shape_cast %10 : vector<16x128xf32> to vector<1x16x128xf32>
      tpu.vector_store %arg8[%c0_6, %c0_7, %c0_8], %13 {strides = array<i32>} : memref<1x48x128xf32, #tpu.memory_space<vmem>>, vector<1x16x128xf32>,
      %c16 = arith.constant 16 : index
      %c0_9 = arith.constant 0 : index
      %14 = vector.load %arg9[%c16, %c0_9] : memref<48x128xf32, #tpu.memory_space<vmem>>, vector<16x128xf32>
      %c0_10 = arith.constant 0 : index
      %c16_11 = arith.constant 16 : index
      %c0_12 = arith.constant 0 : index
      %15 = vector.load %arg8[%c0_10, %c16_11, %c0_12] : memref<1x48x128xf32, #tpu.memory_space<vmem>>, vector<1x16x128xf32>
      %16 = vector.shape_cast %15 : vector<1x16x128xf32> to vector<16x128xf32>
      %17 = vector.shape_cast %14 : vector<16x128xf32> to vector<1x16x128xf32>
      tpu.vector_store %arg8[%c0_10, %c16_11, %c0_12], %17 {strides = array<i32>} : memref<1x48x128xf32, #tpu.memory_space<vmem>>, vector<1x16x128xf32>,
      %c32 = arith.constant 32 : index
      %c0_13 = arith.constant 0 : index
      %18 = vector.load %arg9[%c32, %c0_13] : memref<48x128xf32, #tpu.memory_space<vmem>>, vector<16x128xf32>
      %c0_14 = arith.constant 0 : index
      %c32_15 = arith.constant 32 : index
      %c0_16 = arith.constant 0 : index
      %19 = vector.load %arg8[%c0_14, %c32_15, %c0_16] : memref<1x48x128xf32, #tpu.memory_space<vmem>>, vector<1x16x128xf32>
      %20 = vector.shape_cast %19 : vector<1x16x128xf32> to vector<16x128xf32>
      %21 = vector.shape_cast %18 : vector<16x128xf32> to vector<1x16x128xf32>
      tpu.vector_store %arg8[%c0_14, %c32_15, %c0_16], %21 {strides = array<i32>} : memref<1x48x128xf32, #tpu.memory_space<vmem>>, vector<1x16x128xf32>,
    } else {
    }
    %c0_i32_3 = arith.constant 0 : i32
    %7 = arith.cmpi sgt, %arg2, %c0_i32_3 : i32
    %8 = arith.extui %7 : i1 to i32
    %c0_i32_4 = arith.constant 0 : i32
    %9 = arith.cmpi ne, %8, %c0_i32_4 : i32
    scf.if %9 {
      %c0 = arith.constant 0 : index
      %c0_5 = arith.constant 0 : index
      %c0_6 = arith.constant 0 : index
      %10 = vector.load %arg7[%c0, %c0_5, %c0_6] : memref<1x128x128xf32, #tpu.memory_space<vmem>>, vector<1x128x128xf32>
      %11 = vector.shape_cast %10 : vector<1x128x128xf32> to vector<128x128xf32>
      %c0_7 = arith.constant 0 : index
      %c0_8 = arith.constant 0 : index
      %c0_9 = arith.constant 0 : index
      %12 = vector.load %arg6[%c0_7, %c0_8, %c0_9] : memref<1x16x16xf32, #tpu.memory_space<vmem>>, vector<1x16x16xf32>
      %13 = vector.shape_cast %12 : vector<1x16x16xf32> to vector<16x16xf32>
      %c0_10 = arith.constant 0 : index
      %c0_11 = arith.constant 0 : index
      %14 = vector.load %arg9[%c0_10, %c0_11] : memref<48x128xf32, #tpu.memory_space<vmem>>, vector<16x128xf32>
      %cst = arith.constant dense<0.000000e+00> : vector<16x128xf32>
      %15 = tpu.matmul %14, %11, %cst {dimension_numbers = #tpu.dot_dimension_numbers<[1], [0], [0], [1], [0, 0, 1, 1], [], []>} : vector<16x128xf32>, vector<128x128xf32>, vector<16x128xf32> -> vector<16x128xf32>
      %cst_12 = arith.constant dense<0.000000e+00> : vector<16x128xf32>
      %16 = tpu.matmul %13, %15, %cst_12 {dimension_numbers = #tpu.dot_dimension_numbers<[1], [0], [0], [1], [0, 0, 1, 1], [], []>} : vector<16x16xf32>, vector<16x128xf32>, vector<16x128xf32> -> vector<16x128xf32>
      %c0_13 = arith.constant 0 : index
      %c0_14 = arith.constant 0 : index
      %c0_15 = arith.constant 0 : index
      %17 = vector.load %arg8[%c0_13, %c0_14, %c0_15] : memref<1x48x128xf32, #tpu.memory_space<vmem>>, vector<1x16x128xf32>
      %18 = vector.shape_cast %17 : vector<1x16x128xf32> to vector<16x128xf32>
      %19 = arith.maximumf %18, %16 : vector<16x128xf32>
      %c0_16 = arith.constant 0 : index
      %c0_17 = arith.constant 0 : index
      %c0_18 = arith.constant 0 : index
      %20 = vector.load %arg8[%c0_16, %c0_17, %c0_18] : memref<1x48x128xf32, #tpu.memory_space<vmem>>, vector<1x16x128xf32>
      %21 = vector.shape_cast %20 : vector<1x16x128xf32> to vector<16x128xf32>
      %22 = vector.shape_cast %19 : vector<16x128xf32> to vector<1x16x128xf32>
      tpu.vector_store %arg8[%c0_16, %c0_17, %c0_18], %22 {strides = array<i32>} : memref<1x48x128xf32, #tpu.memory_space<vmem>>, vector<1x16x128xf32>,
      %c16 = arith.constant 16 : index
      %c0_19 = arith.constant 0 : index
      %23 = vector.load %arg9[%c16, %c0_19] : memref<48x128xf32, #tpu.memory_space<vmem>>, vector<16x128xf32>
      %cst_20 = arith.constant dense<0.000000e+00> : vector<16x128xf32>
      %24 = tpu.matmul %23, %11, %cst_20 {dimension_numbers = #tpu.dot_dimension_numbers<[1], [0], [0], [1], [0, 0, 1, 1], [], []>} : vector<16x128xf32>, vector<128x128xf32>, vector<16x128xf32> -> vector<16x128xf32>
      %cst_21 = arith.constant dense<0.000000e+00> : vector<16x128xf32>
      %25 = tpu.matmul %13, %24, %cst_21 {dimension_numbers = #tpu.dot_dimension_numbers<[1], [0], [0], [1], [0, 0, 1, 1], [], []>} : vector<16x16xf32>, vector<16x128xf32>, vector<16x128xf32> -> vector<16x128xf32>
      %c0_22 = arith.constant 0 : index
      %c16_23 = arith.constant 16 : index
      %c0_24 = arith.constant 0 : index
      %26 = vector.load %arg8[%c0_22, %c16_23, %c0_24] : memref<1x48x128xf32, #tpu.memory_space<vmem>>, vector<1x16x128xf32>
      %27 = vector.shape_cast %26 : vector<1x16x128xf32> to vector<16x128xf32>
      %28 = arith.maximumf %27, %25 : vector<16x128xf32>
      %c0_25 = arith.constant 0 : index
      %c16_26 = arith.constant 16 : index
      %c0_27 = arith.constant 0 : index
      %29 = vector.load %arg8[%c0_25, %c16_26, %c0_27] : memref<1x48x128xf32, #tpu.memory_space<vmem>>, vector<1x16x128xf32>
      %30 = vector.shape_cast %29 : vector<1x16x128xf32> to vector<16x128xf32>
      %31 = vector.shape_cast %28 : vector<16x128xf32> to vector<1x16x128xf32>
      tpu.vector_store %arg8[%c0_25, %c16_26, %c0_27], %31 {strides = array<i32>} : memref<1x48x128xf32, #tpu.memory_space<vmem>>, vector<1x16x128xf32>,
      %c32 = arith.constant 32 : index
      %c0_28 = arith.constant 0 : index
      %32 = vector.load %arg9[%c32, %c0_28] : memref<48x128xf32, #tpu.memory_space<vmem>>, vector<16x128xf32>
      %cst_29 = arith.constant dense<0.000000e+00> : vector<16x128xf32>
      %33 = tpu.matmul %32, %11, %cst_29 {dimension_numbers = #tpu.dot_dimension_numbers<[1], [0], [0], [1], [0, 0, 1, 1], [], []>} : vector<16x128xf32>, vector<128x128xf32>, vector<16x128xf32> -> vector<16x128xf32>
      %cst_30 = arith.constant dense<0.000000e+00> : vector<16x128xf32>
      %34 = tpu.matmul %13, %33, %cst_30 {dimension_numbers = #tpu.dot_dimension_numbers<[1], [0], [0], [1], [0, 0, 1, 1], [], []>} : vector<16x16xf32>, vector<16x128xf32>, vector<16x128xf32> -> vector<16x128xf32>
      %c0_31 = arith.constant 0 : index
      %c32_32 = arith.constant 32 : index
      %c0_33 = arith.constant 0 : index
      %35 = vector.load %arg8[%c0_31, %c32_32, %c0_33] : memref<1x48x128xf32, #tpu.memory_space<vmem>>, vector<1x16x128xf32>
      %36 = vector.shape_cast %35 : vector<1x16x128xf32> to vector<16x128xf32>
      %37 = arith.maximumf %36, %34 : vector<16x128xf32>
      %c0_34 = arith.constant 0 : index
      %c32_35 = arith.constant 32 : index
      %c0_36 = arith.constant 0 : index
      %38 = vector.load %arg8[%c0_34, %c32_35, %c0_36] : memref<1x48x128xf32, #tpu.memory_space<vmem>>, vector<1x16x128xf32>
      %39 = vector.shape_cast %38 : vector<1x16x128xf32> to vector<16x128xf32>
      %40 = vector.shape_cast %37 : vector<16x128xf32> to vector<1x16x128xf32>
      tpu.vector_store %arg8[%c0_34, %c32_35, %c0_36], %40 {strides = array<i32>} : memref<1x48x128xf32, #tpu.memory_space<vmem>>, vector<1x16x128xf32>,
    } else {
    }
    return
  }
  func.func @transform_0(%arg0: i32, %arg1: i32, %arg2: i32) -> (i32, i32) {
    %c0_i32 = arith.constant 0 : i32
    %c0_i32_0 = arith.constant 0 : i32
    %c0_i32_1 = arith.constant 0 : i32
    return %c0_i32, %c0_i32_0 : i32, i32
  }
  func.func @transform_1(%arg0: i32, %arg1: i32, %arg2: i32) -> i32 {
    %c0_i32 = arith.constant 0 : i32
    %c0_i32_0 = arith.constant 0 : i32
    return %c0_i32 : i32
  }
  func.func @transform_2(%arg0: i32, %arg1: i32, %arg2: i32) -> (i32, i32, i32) {
    %c0_i32 = arith.constant 0 : i32
    %c0_i32_0 = arith.constant 0 : i32
    %c0_i32_1 = arith.constant 0 : i32
    return %arg0, %c0_i32, %c0_i32_0 : i32, i32, i32
  }
  func.func @transform_3(%arg0: i32, %arg1: i32, %arg2: i32) -> (i32, i32, i32) {
    %c0_i32 = arith.constant 0 : i32
    %c0_i32_0 = arith.constant 0 : i32
    %c0_i32_1 = arith.constant 0 : i32
    return %arg2, %c0_i32, %c0_i32_0 : i32, i32, i32
  }
  func.func @transform_4(%arg0: i32, %arg1: i32, %arg2: i32) -> (i32, i32, i32) {
    %c0_i32 = arith.constant 0 : i32
    %c0_i32_0 = arith.constant 0 : i32
    %c0_i32_1 = arith.constant 0 : i32
    return %arg2, %c0_i32, %c0_i32_0 : i32, i32, i32
  }
  func.func @transform_5(%arg0: i32, %arg1: i32, %arg2: i32) -> (i32, i32, i32) {
    %c0_i32 = arith.constant 0 : i32
    %c0_i32_0 = arith.constant 0 : i32
    return %arg0, %arg1, %c0_i32 : i32, i32, i32
  }
}

</mosaic_0001>

<llo_original>
// kernel: tpu_custom_call.1
$region0: #{tpu_custom_call.1}
  #allocation0 [shape = 'u32[]', space=smem, size = 0x4, offset = 0x4, fixed_abs, tag = 'smem constant byte address 0x4 - core index']
  #allocation1 [shape = 'u32[72,128]{1,0:T(1,128)}', space=vmem, size = 0x9000, scoped, tag = 'internal scratch']
  #allocation2 [shape = 'f32[48,128]{1,0:T(8,128)}', space=vmem, size = 0x6000, scoped, tag = 'scratch operand']
  %s0 = inlined_call_operand.hbm [shape: f32[3,4], index: 0, kind: input, shape index: {}]
  %s1 = inlined_call_operand.hbm [shape: f32[3], index: 1, kind: input, shape index: {}]
  %s2 = inlined_call_operand.hbm [shape: f32[2,64,128], index: 2, kind: input, shape index: {}]
  %s3 = inlined_call_operand.hbm [shape: f32[3,16,16], index: 3, kind: input, shape index: {}]
  %s4 = inlined_call_operand.hbm [shape: f32[3,128,128], index: 4, kind: input, shape index: {}]
  %s5 = inlined_call_operand.hbm [shape: f32[2,48,128], index: 5, kind: output, shape index: {}]
  %s6 = sld [smem:[#allocation0]]
  $region81: #{tpu_custom_call.1} parent=0
    _
  %s8 = ssub.s32 1, %s6
  %s9 = scalar_select 0, %s8, %s6
  $region1: #{tpu_custom_call.1} parent=0
    #allocation3 [shape = 'u8[2048]{0}', space=smem, size = 0x800, scoped, tag = 'input window, operand 0, single buffered']
    #allocation4 [shape = 's32[2]{0}', space=sflag, size = 0x8, scoped, tag = 'scoped memory for tpu_custom_call.1']
    #allocation5 [shape = 's32[2]{0}', space=sflag, size = 0x8, scoped, tag = 'scoped memory for tpu_custom_call.1']
    #allocation6 [shape = 's32[2]{0}', space=sflag, size = 0x8, scoped, tag = 'scoped memory for tpu_custom_call.1']
    #allocation7 [shape = 'u8[512]{0}', space=smem, size = 0x200, scoped, tag = 'input window, operand 1, single buffered']
    #allocation8 [shape = 's32[1]{0}', space=sflag, size = 0x4, scoped, tag = 'scoped memory for tpu_custom_call.1']
    #allocation9 [shape = 'u8[65536]{0}', space=vmem, size = 0x10000, scoped, tag = 'input window, operand 2']
    #allocation10 [shape = 'u8[16384]{0}', space=vmem, size = 0x4000, scoped, tag = 'input window, operand 3']
    #allocation11 [shape = 's32[2]{0}', space=sflag, size = 0x8, scoped, tag = 'scoped memory for tpu_custom_call.1']
    #allocation12 [shape = 'u8[131072]{0}', space=vmem, size = 0x20000, scoped, tag = 'input window, operand 4']
    #allocation13 [shape = 'u8[49152]{0}', space=vmem, size = 0xc000, scoped, tag = 'output window, operand 0']
    %10 = vsyncpa [#allocation6], 0
    %11 = vsyncpa [#allocation8], 0
    %12 = vsyncpa [#allocation4], 0
    %s13 = scalar_lea.sflag [#allocation4], 1
    %14 = vsyncpa %s13, 0
    %15 = vsyncpa [#allocation11], 0
    %s16 = scalar_lea.sflag [#allocation11], 1
    %17 = vsyncpa %s16, 0
    %18 = vsyncpa [#allocation5], 0
    %s19 = scalar_lea.sflag [#allocation5], 1
    %20 = vsyncpa %s19, 0
    loop: start=0, step=1, limit=8
    $region2: #{tpu_custom_call.1} parent=1 // loop_pre_header
      _
    $region3: #{tpu_custom_call.1} parent=1 // loop_header
      %s22 = sphi 0, %s26
      %p23 = scmp.ge.s32.totalorder %s22, 8
      %s29 = sphi 0, %s48
      %s30 = sphi 0, %s44
      %s31 = sphi 0, %s40
      %s32 = sphi 0, %s29
      %s33 = sphi 0, %s30
      %s34 = sphi 0, %s31
      %s35 = sphi 0, %s32
      %s36 = sphi 0, %s33
      %s37 = sphi 0, %s34
      %s49 = sphi 0, %s49
      %s51 = sphi 0, %s49
      %s52 = sphi 0, %s51
      %s66 = sphi 0, %s52
      %s70 = sphi 0, %s70
      %s72 = sphi 0, %s70
      %s73 = sphi 0, %s72
      %s87 = sphi 0, %s73
      %s93 = sphi 0, %s95
      %s96 = sphi 0, %s93
      %s97 = sphi 0, %s96
      %s113 = sphi 0, %s97
      %s119 = sphi 0, %s121
      %s122 = sphi 0, %s119
      %s123 = sphi 0, %s122
      %s139 = sphi 0, %s123
      %s145 = sphi 0, %s147
      %s148 = sphi 0, %s145
      %s149 = sphi 0, %s148
      %s165 = sphi 0, %s149
      %s173 = sphi 0, %s175
      %s176 = sphi 0, %s173
      %s177 = sphi 0, %s176
      %s193 = sphi 0, %s177
    $region4: #{tpu_custom_call.1} parent=1 // loop_header_branch
      %25 = sbr.rel (%p23) target = $region8
    $region5: #{tpu_custom_call.1} parent=1 // loop_body
      %s27 = ssub.s32 %s22, 1
      %s28 = ssub.s32 %s22, 2
      %s38 = sadd.s32 1, %s31
      %p39 = scmp.ge.s32.totalorder %s38, 3
      %s40 = scalar_select %p39, 0, %s38
      %s41 = sadd.s32 1, %s30
      %s42 = scalar_select %p39, %s41, %s30
      %p43 = scmp.ge.s32.totalorder %s42, 1
      %s44 = scalar_select %p43, 0, %s42
      %s45 = sadd.s32 1, %s29
      %s46 = scalar_select %p43, %s45, %s29
      %p47 = scmp.ge.s32.totalorder %s46, 2
      %s48 = scalar_select %p47, 0, %s46
      %s50 = sadd.s32 %s49, 1
      %p53 = scmp.eq.s32.totalorder %s22, 5
      %p54 = scmp.ne.s32.totalorder %s49, %s51
      %p55 = scmp.eq.s32.totalorder %s22, 0
      %p56 = por %p54, %p55
      %p57 = scmp.ne.s32.totalorder %s49, %s51
      %p58 = scmp.eq.s32.totalorder %s27, 5
      %p59 = por %p57, %p58
      %p60 = scmp.ne.s32.totalorder %s51, %s52
      %p61 = scmp.eq.s32.totalorder %s27, 0
      %p62 = por %p60, %p61
      %p63 = scmp.ne.s32.totalorder %s51, %s52
      %p64 = scmp.eq.s32.totalorder %s28, 5
      %p65 = por %p63, %p64
      %p67 = scmp.ne.s32.totalorder %s52, %s66
      %p68 = scmp.eq.s32.totalorder %s28, 0
      %p69 = por %p67, %p68
      %s71 = sadd.s32 %s70, 1
      %p74 = scmp.eq.s32.totalorder %s22, 5
      %p75 = scmp.ne.s32.totalorder %s70, %s72
      %p76 = scmp.eq.s32.totalorder %s22, 0
      %p77 = por %p75, %p76
      %p78 = scmp.ne.s32.totalorder %s70, %s72
      %p79 = scmp.eq.s32.totalorder %s27, 5
      %p80 = por %p78, %p79
      %p81 = scmp.ne.s32.totalorder %s72, %s73
      %p82 = scmp.eq.s32.totalorder %s27, 0
      %p83 = por %p81, %p82
      %p84 = scmp.ne.s32.totalorder %s72, %s73
      %p85 = scmp.eq.s32.totalorder %s28, 5
      %p86 = por %p84, %p85
      %p88 = scmp.ne.s32.totalorder %s73, %s87
      %p89 = scmp.eq.s32.totalorder %s28, 0
      %p90 = por %p88, %p89
      %s91 = ssub.s32 %s29, %s48
      %p92 = scmp.eq.s32.totalorder %s91, 0
      %s94 = sadd.s32 %s93, 1
      %s95 = scalar_select %p92, %s93, %s94
      %p98 = pneg %p92
      %p99 = scmp.eq.s32.totalorder %s22, 5
      %p100 = por %p98, %p99
      %p101 = scmp.ne.s32.totalorder %s93, %s96
      %p102 = scmp.eq.s32.totalorder %s22, 0
      %p103 = por %p101, %p102
      %p104 = scmp.ne.s32.totalorder %s93, %s96
      %p105 = scmp.eq.s32.totalorder %s27, 5
      %p106 = por %p104, %p105
      %p107 = scmp.ne.s32.totalorder %s96, %s97
      %p108 = scmp.eq.s32.totalorder %s27, 0
      %p109 = por %p107, %p108
      %p110 = scmp.ne.s32.totalorder %s96, %s97
      %p111 = scmp.eq.s32.totalorder %s28, 5
      %p112 = por %p110, %p111
      %p114 = scmp.ne.s32.totalorder %s97, %s113
      %p115 = scmp.eq.s32.totalorder %s28, 0
      %p116 = por %p114, %p115
      %s117 = ssub.s32 %s31, %s40
      %p118 = scmp.eq.s32.totalorder %s117, 0
      %s120 = sadd.s32 %s119, 1
      %s121 = scalar_select %p118, %s119, %s120
      %p124 = pneg %p118
      %p125 = scmp.eq.s32.totalorder %s22, 5
      %p126 = por %p124, %p125
      %p127 = scmp.ne.s32.totalorder %s119, %s122
      %p128 = scmp.eq.s32.totalorder %s22, 0
      %p129 = por %p127, %p128
      %p130 = scmp.ne.s32.totalorder %s119, %s122
      %p131 = scmp.eq.s32.totalorder %s27, 5
      %p132 = por %p130, %p131
      %p133 = scmp.ne.s32.totalorder %s122, %s123
      %p134 = scmp.eq.s32.totalorder %s27, 0
      %p135 = por %p133, %p134
      %p136 = scmp.ne.s32.totalorder %s122, %s123
      %p137 = scmp.eq.s32.totalorder %s28, 5
      %p138 = por %p136, %p137
      %p140 = scmp.ne.s32.totalorder %s123, %s139
      %p141 = scmp.eq.s32.totalorder %s28, 0
      %p142 = por %p140, %p141
      %s143 = ssub.s32 %s31, %s40
      %p144 = scmp.eq.s32.totalorder %s143, 0
      %s146 = sadd.s32 %s145, 1
      %s147 = scalar_select %p144, %s145, %s146
      %p150 = pneg %p144
      %p151 = scmp.eq.s32.totalorder %s22, 5
      %p152 = por %p150, %p151
      %p153 = scmp.ne.s32.totalorder %s145, %s148
      %p154 = scmp.eq.s32.totalorder %s22, 0
      %p155 = por %p153, %p154
      %p156 = scmp.ne.s32.totalorder %s145, %s148
      %p157 = scmp.eq.s32.totalorder %s27, 5
      %p158 = por %p156, %p157
      %p159 = scmp.ne.s32.totalorder %s148, %s149
      %p160 = scmp.eq.s32.totalorder %s27, 0
      %p161 = por %p159, %p160
      %p162 = scmp.ne.s32.totalorder %s148, %s149
      %p163 = scmp.eq.s32.totalorder %s28, 5
      %p164 = por %p162, %p163
      %p166 = scmp.ne.s32.totalorder %s149, %s165
      %p167 = scmp.eq.s32.totalorder %s28, 0
      %p168 = por %p166, %p167
      %s169 = ssub.s32 %s29, %s48
      %s170 = ssub.s32 %s30, %s44
      %s171 = sor.u32 %s169, %s170
      %p172 = scmp.eq.s32.totalorder %s171, 0
      %s174 = sadd.s32 %s173, 1
      %s175 = scalar_select %p172, %s173, %s174
      %p178 = pneg %p172
      %p179 = scmp.eq.s32.totalorder %s22, 5
      %p180 = por %p178, %p179
      %p181 = scmp.ne.s32.totalorder %s173, %s176
      %p182 = scmp.eq.s32.totalorder %s22, 0
      %p183 = por %p181, %p182
      %p184 = scmp.ne.s32.totalorder %s173, %s176
      %p185 = scmp.eq.s32.totalorder %s27, 5
      %p186 = por %p184, %p185
      %p187 = scmp.ne.s32.totalorder %s176, %s177
      %p188 = scmp.eq.s32.totalorder %s27, 0
      %p189 = por %p187, %p188
      %p190 = scmp.ne.s32.totalorder %s176, %s177
      %p191 = scmp.eq.s32.totalorder %s28, 5
      %p192 = por %p190, %p191
      %p194 = scmp.ne.s32.totalorder %s177, %s193
      %p195 = scmp.eq.s32.totalorder %s28, 0
      %p196 = por %p194, %p195
      %p197 = scmp.le.s32.totalorder 1, %s22
      %p198 = scmp.lt.s32.totalorder %s22, 7
      %p199 = pnand %p197, %p198
      %p200 = pneg %p199
      // Predicated region
      $region9: #{tpu_custom_call.1} parent=5 // pred_check
        _
      $region10: #{tpu_custom_call.1} parent=5 // pred_check_branch
        %202 = sbr.rel (%p199) target = $region12
      $region11: #{tpu_custom_call.1} parent=5 // pred_region
        %s203 = ssub.s32 %s22, 1
        // Predicated region
        $region13: #{tpu_custom_call.1} parent=11 // pred_check
          %p204 = pneg %p62
        $region14: #{tpu_custom_call.1} parent=11 // pred_check_branch
          %206 = sbr.rel (%p204) target = $region16
        $region15: #{tpu_custom_call.1} parent=11 // pred_region
          %208 = vsyncadd [#allocation6], 0
          %s210 = sshll.u32 %s0, 4
          %s211 = int_to_ptr.hbm [resolvable:$true] %s210
          %213 = dma.hbm_to_smem %s211, 64, [#allocation3], [#allocation6]
        $region16: #{tpu_custom_call.1} parent=11 // pred_fallthru
          _
        // Predicated region
        $region17: #{tpu_custom_call.1} parent=11 // pred_check
          %p214 = pneg %p83
        $region18: #{tpu_custom_call.1} parent=11 // pred_check_branch
          %216 = sbr.rel (%p214) target = $region20
        $region19: #{tpu_custom_call.1} parent=11 // pred_region
          %218 = vsyncadd [#allocation8], 0
          %s220 = sshll.u32 %s1, 4
          %s221 = int_to_ptr.hbm [resolvable:$true] %s220
          %223 = dma.hbm_to_smem %s221, 16, [#allocation7], [#allocation8]
        $region20: #{tpu_custom_call.1} parent=11 // pred_fallthru
          _
      $region12: #{tpu_custom_call.1} parent=5 // pred_fallthru
        _
      %p224 = scmp.lt.s32.totalorder %s22, 6
      // Predicated region
      $region21: #{tpu_custom_call.1} parent=5 // pred_check
        %p225 = pneg %p224
      $region22: #{tpu_custom_call.1} parent=5 // pred_check_branch
        %227 = sbr.rel (%p225) target = $region24
      $region23: #{tpu_custom_call.1} parent=5 // pred_region
        // Predicated region
        $region25: #{tpu_custom_call.1} parent=23 // pred_check
          %p228 = pneg %p103
        $region26: #{tpu_custom_call.1} parent=23 // pred_check_branch
          %230 = sbr.rel (%p228) target = $region28
        $region27: #{tpu_custom_call.1} parent=23 // pred_region
          %s231 = sand.u32 %s93, 1
          %s232 = scalar_lea.sflag [#allocation4], %s231
          %s233 = sand.u32 %s93, 1
          %s234 = smul.addr %s233, 64
          %s235 = scalar_lea.vmem [#allocation9], %s234
          %237 = vsyncadd %s232, 0
          %s238 = smul.addr %s29, 8
          %s239 = smul.addr %s238, 8
          %s240 = scalar_lea.hbm %s2, %s239
          %s241 = sshll.u32 %s240, 4
          %s242 = int_to_ptr.hbm [resolvable:$true] %s241
          %s243 = sshll.u32 %s235, 4
          %s244 = int_to_ptr.vmem [resolvable:$true] %s243
          %249 = dma.hbm_to_vmem [thread:$0]  %s242, 1024, %s244, %s232, 128, 128, 8
        $region28: #{tpu_custom_call.1} parent=23 // pred_fallthru
          _
        // Predicated region
        $region29: #{tpu_custom_call.1} parent=23 // pred_check
          %p250 = pneg %p129
        $region30: #{tpu_custom_call.1} parent=23 // pred_check_branch
          %252 = sbr.rel (%p250) target = $region32
        $region31: #{tpu_custom_call.1} parent=23 // pred_region
          %s253 = sand.u32 %s22, 1
          %s254 = scalar_lea.sflag [#allocation11], %s253
          %s255 = sand.u32 %s119, 1
          %s256 = smul.addr %s255, 16
          %s257 = scalar_lea.vmem [#allocation10], %s256
          %259 = vsyncadd %s254, 0
          %s260 = smul.addr %s31, 2
          %s261 = smul.addr %s260, 8
          %s262 = scalar_lea.hbm %s3, %s261
          %s263 = sshll.u32 %s262, 4
          %s264 = int_to_ptr.hbm [resolvable:$true] %s263
          %s265 = sshll.u32 %s257, 4
          %s266 = int_to_ptr.vmem [resolvable:$true] %s265
          %271 = dma.hbm_to_vmem [thread:$0]  %s264, 256, %s266, %s254, 128, 128, 8
        $region32: #{tpu_custom_call.1} parent=23 // pred_fallthru
          _
        // Predicated region
        $region33: #{tpu_custom_call.1} parent=23 // pred_check
          %p272 = pneg %p155
        $region34: #{tpu_custom_call.1} parent=23 // pred_check_branch
          %274 = sbr.rel (%p272) target = $region36
        $region35: #{tpu_custom_call.1} parent=23 // pred_region
          %s275 = sand.u32 %s22, 1
          %s276 = scalar_lea.sflag [#allocation11], %s275
          %s277 = sand.u32 %s145, 1
          %s278 = smul.addr %s277, 128
          %s279 = scalar_lea.vmem [#allocation12], %s278
          %281 = vsyncadd %s276, 0
          %s282 = smul.addr %s31, 16
          %s283 = smul.addr %s282, 8
          %s284 = scalar_lea.hbm %s4, %s283
          %s285 = sshll.u32 %s284, 4
          %s286 = int_to_ptr.hbm [resolvable:$true] %s285
          %s287 = sshll.u32 %s279, 4
          %s288 = int_to_ptr.vmem [resolvable:$true] %s287
          %293 = dma.hbm_to_vmem [thread:$0]  %s286, 2048, %s288, %s276, 128, 128, 8
        $region36: #{tpu_custom_call.1} parent=23 // pred_fallthru
          _
      $region24: #{tpu_custom_call.1} parent=5 // pred_fallthru
        _
      %p294 = scmp.le.s32.totalorder 1, %s22
      %p295 = scmp.lt.s32.totalorder %s22, 7
      %p296 = pnand %p294, %p295
      %p297 = pneg %p296
      // Predicated region
      $region37: #{tpu_custom_call.1} parent=5 // pred_check
        _
      $region38: #{tpu_custom_call.1} parent=5 // pred_check_branch
        %299 = sbr.rel (%p296) target = $region40
      $region39: #{tpu_custom_call.1} parent=5 // pred_region
        %s300 = ssub.s32 %s22, 1
        // Predicated region
        $region41: #{tpu_custom_call.1} parent=39 // pred_check
          %p301 = pneg %p62
        $region42: #{tpu_custom_call.1} parent=39 // pred_check_branch
          %303 = sbr.rel (%p301) target = $region44
        $region43: #{tpu_custom_call.1} parent=39 // pred_region
          %305 = dma.done [#allocation6], 64
        $region44: #{tpu_custom_call.1} parent=39 // pred_fallthru
          _
        // Predicated region
        $region45: #{tpu_custom_call.1} parent=39 // pred_check
          %p306 = pneg %p83
        $region46: #{tpu_custom_call.1} parent=39 // pred_check_branch
          %308 = sbr.rel (%p306) target = $region48
        $region47: #{tpu_custom_call.1} parent=39 // pred_region
          %310 = dma.done [#allocation8], 16
        $region48: #{tpu_custom_call.1} parent=39 // pred_fallthru
          _
        %s311 = sand.u32 %s96, 1
        %s312 = scalar_lea.sflag [#allocation4], %s311
        %s313 = sand.u32 %s96, 1
        %s314 = smul.addr %s313, 64
        %s315 = scalar_lea.vmem [#allocation9], %s314
        // Predicated region
        $region49: #{tpu_custom_call.1} parent=39 // pred_check
          %p316 = pneg %p109
        $region50: #{tpu_custom_call.1} parent=39 // pred_check_branch
          %318 = sbr.rel (%p316) target = $region52
        $region51: #{tpu_custom_call.1} parent=39 // pred_region
          %320 = dma.done %s312, 1024
        $region52: #{tpu_custom_call.1} parent=39 // pred_fallthru
          _
        %s321 = sand.u32 %s27, 1
        %s322 = scalar_lea.sflag [#allocation11], %s321
        %s323 = sand.u32 %s122, 1
        %s324 = smul.addr %s323, 16
        %s325 = scalar_lea.vmem [#allocation10], %s324
        // Predicated region
        $region53: #{tpu_custom_call.1} parent=39 // pred_check
          %p326 = pneg %p135
        $region54: #{tpu_custom_call.1} parent=39 // pred_check_branch
          %328 = sbr.rel (%p326) target = $region56
        $region55: #{tpu_custom_call.1} parent=39 // pred_region
          %330 = dma.done %s322, 256
        $region56: #{tpu_custom_call.1} parent=39 // pred_fallthru
          _
        %s331 = sand.u32 %s27, 1
        %s332 = scalar_lea.sflag [#allocation11], %s331
        %s333 = sand.u32 %s148, 1
        %s334 = smul.addr %s333, 128
        %s335 = scalar_lea.vmem [#allocation12], %s334
        // Predicated region
        $region57: #{tpu_custom_call.1} parent=39 // pred_check
          %p336 = pneg %p161
        $region58: #{tpu_custom_call.1} parent=39 // pred_check_branch
          %338 = sbr.rel (%p336) target = $region60
        $region59: #{tpu_custom_call.1} parent=39 // pred_region
          %340 = dma.done %s332, 2048
        $region60: #{tpu_custom_call.1} parent=39 // pred_fallthru
          _
        %341 = sfence
        %p342 = pneg %p62
        %p343 = pneg %p59
        %p344 = pneg %p83
        %p345 = pneg %p80
        %s346 = sand.u32 %s96, 1
        %s347 = scalar_lea.sflag [#allocation4], %s346
        %s348 = sand.u32 %s96, 1
        %s349 = smul.addr %s348, 64
        %s350 = scalar_lea.vmem [#allocation9], %s349
        %p351 = pneg %p109
        %p352 = pneg %p106
        %s353 = sand.u32 %s27, 1
        %s354 = scalar_lea.sflag [#allocation11], %s353
        %s355 = sand.u32 %s122, 1
        %s356 = smul.addr %s355, 16
        %s357 = scalar_lea.vmem [#allocation10], %s356
        %p358 = pneg %p135
        %p359 = pneg %p132
        %s360 = sand.u32 %s27, 1
        %s361 = scalar_lea.sflag [#allocation11], %s360
        %s362 = sand.u32 %s148, 1
        %s363 = smul.addr %s362, 128
        %s364 = scalar_lea.vmem [#allocation12], %s363
        %p365 = pneg %p161
        %p366 = pneg %p158
        %p367 = pneg %p189
        %p368 = pneg %p186
        %s369 = sand.u32 %s176, 1
        %s370 = scalar_lea.sflag [#allocation5], %s369
        %s371 = sand.u32 %s176, 1
        %s372 = smul.addr %s371, 48
        %s373 = scalar_lea.vmem [#allocation13], %s372
        %s374 = smul.u32 6, %s33
        %s375 = smul.u32 %s33, 3
        %p376 = scmp.eq.s32.totalorder %s34, 0
        // Predicated region
        $region61: #{tpu_custom_call.1} parent=39 // pred_check
          %p377 = pneg %p376
        $region62: #{tpu_custom_call.1} parent=39 // pred_check_branch
          %379 = sbr.rel (%p377) target = $region64
        $region63: #{tpu_custom_call.1} parent=39 // pred_region
          %v380 = vld [vmem:[%s315] sm:$0xff]
          %v381 = vld [vmem:[%s315 + $0x8] sm:$0xff]
          %s382 = smul.u32 %s375, 128
          %s383 = sld [smem:[#allocation3 + %s382]]
          %v384 = vstv %s383
          %v385 = vmul.f32 %v384, %v380
          %v386 = vmul.f32 %v384, %v381
          %s387 = sadd.s32 %s375, 1
          %s388 = smul.u32 %s387, 128
          %s389 = sld [smem:[#allocation3 + %s388]]
          %v390 = vstv %s389
          %v391 = vmul.f32 %v390, %v380
          %v392 = vmul.f32 %v390, %v381
          %s393 = sadd.s32 %s375, 2
          %s394 = smul.u32 %s393, 128
          %s395 = sld [smem:[#allocation3 + %s394]]
          %v396 = vstv %s395
          %v397 = vmul.f32 %v396, %v380
          %v398 = vmul.f32 %v396, %v381
          %v399 = vld [vmem:[%s315 + $0x10] sm:$0xff]
          %v400 = vld [vmem:[%s315 + $0x18] sm:$0xff]
          %s401 = sadd.s32 %s382, 1
          %s402 = sld [smem:[#allocation3 + %s401]]
          %v403 = vstv %s402
          %v404 = vmul.f32 %v403, %v399
          %v405 = vmul.f32 %v403, %v400
          %v406 = vadd.f32 %v385, %v404
          %v407 = vadd.f32 %v386, %v405
          %s408 = sadd.s32 %s388, 1
          %s409 = sld [smem:[#allocation3 + %s408]]
          %v410 = vstv %s409
          %v411 = vmul.f32 %v410, %v399
          %v412 = vmul.f32 %v410, %v400
          %v413 = vadd.f32 %v391, %v411
          %v414 = vadd.f32 %v392, %v412
          %s415 = sadd.s32 %s394, 1
          %s416 = sld [smem:[#allocation3 + %s415]]
          %v417 = vstv %s416
          %v418 = vmul.f32 %v417, %v399
          %v419 = vmul.f32 %v417, %v400
          %v420 = vadd.f32 %v397, %v418
          %v421 = vadd.f32 %v398, %v419
          %v422 = vld [vmem:[%s315 + $0x20] sm:$0xff]
          %v423 = vld [vmem:[%s315 + $0x28] sm:$0xff]
          %s424 = sadd.s32 %s382, 2
          %s425 = sld [smem:[#allocation3 + %s424]]
          %v426 = vstv %s425
          %v427 = vmul.f32 %v426, %v422
          %v428 = vmul.f32 %v426, %v423
          %v429 = vadd.f32 %v406, %v427
          %v430 = vadd.f32 %v407, %v428
          %s431 = sadd.s32 %s388, 2
          %s432 = sld [smem:[#allocation3 + %s431]]
          %v433 = vstv %s432
          %v434 = vmul.f32 %v433, %v422
          %v435 = vmul.f32 %v433, %v423
          %v436 = vadd.f32 %v413, %v434
          %v437 = vadd.f32 %v414, %v435
          %s438 = sadd.s32 %s394, 2
          %s439 = sld [smem:[#allocation3 + %s438]]
          %v440 = vstv %s439
          %v441 = vmul.f32 %v440, %v422
          %v442 = vmul.f32 %v440, %v423
          %v443 = vadd.f32 %v420, %v441
          %v444 = vadd.f32 %v421, %v442
          %v445 = vld [vmem:[%s315 + $0x30] sm:$0xff]
          %v446 = vld [vmem:[%s315 + $0x38] sm:$0xff]
          %s447 = sadd.s32 %s382, 3
          %s448 = sld [smem:[#allocation3 + %s447]]
          %v449 = vstv %s448
          %v450 = vmul.f32 %v449, %v445
          %v451 = vmul.f32 %v449, %v446
          %v452 = vadd.f32 %v429, %v450
          %v453 = vadd.f32 %v430, %v451
          %s454 = sadd.s32 %s388, 3
          %s455 = sld [smem:[#allocation3 + %s454]]
          %v456 = vstv %s455
          %v457 = vmul.f32 %v456, %v445
          %v458 = vmul.f32 %v456, %v446
          %v459 = vadd.f32 %v436, %v457
          %v460 = vadd.f32 %v437, %v458
          %s461 = sadd.s32 %s394, 3
          %s462 = sld [smem:[#allocation3 + %s461]]
          %v463 = vstv %s462
          %v464 = vmul.f32 %v463, %v445
          %v465 = vmul.f32 %v463, %v446
          %v466 = vadd.f32 %v443, %v464
          %v467 = vadd.f32 %v444, %v465
          %s468 = sld [smem:[#allocation7 + %s375]]
          %v469 = vstv %s468
          %v470 = vadd.f32 %v452, %v469
          %v471 = vadd.f32 %v453, %v469
          %472 = vst [vmem:[#allocation2] sm:$0xff] %v470
          %473 = vst [vmem:[#allocation2 + $0x8] sm:$0xff] %v471
          %s474 = sld [smem:[#allocation7 + %s387]]
          %v475 = vstv %s474
          %v476 = vadd.f32 %v459, %v475
          %v477 = vadd.f32 %v460, %v475
          %478 = vst [vmem:[#allocation2 + $0x10] sm:$0xff] %v476
          %479 = vst [vmem:[#allocation2 + $0x18] sm:$0xff] %v477
          %s480 = sld [smem:[#allocation7 + %s393]]
          %v481 = vstv %s480
          %v482 = vadd.f32 %v466, %v481
          %v483 = vadd.f32 %v467, %v481
          %484 = vst [vmem:[#allocation2 + $0x20] sm:$0xff] %v482
          %485 = vst [vmem:[#allocation2 + $0x28] sm:$0xff] %v483
          %v486 = vld [vmem:[#allocation2] sm:$0xff]
          %v487 = vld [vmem:[#allocation2 + $0x8] sm:$0xff]
          %488 = vst [vmem:[%s373] sm:$0xff] %v486
          %489 = vst [vmem:[%s373 + $0x8] sm:$0xff] %v487
          %v490 = vld [vmem:[#allocation2 + $0x10] sm:$0xff]
          %v491 = vld [vmem:[#allocation2 + $0x18] sm:$0xff]
          %492 = vst [vmem:[%s373 + $0x10] sm:$0xff] %v490
          %493 = vst [vmem:[%s373 + $0x18] sm:$0xff] %v491
          %v494 = vld [vmem:[#allocation2 + $0x20] sm:$0xff]
          %v495 = vld [vmem:[#allocation2 + $0x28] sm:$0xff]
          %496 = vst [vmem:[%s373 + $0x20] sm:$0xff] %v494
          %497 = vst [vmem:[%s373 + $0x28] sm:$0xff] %v495
        $region64: #{tpu_custom_call.1} parent=39 // pred_fallthru
          _
        %p498 = scmp.gt.s32.totalorder %s34, 0
        // Predicated region
        $region65: #{tpu_custom_call.1} parent=39 // pred_check
          %p499 = pneg %p498
        $region66: #{tpu_custom_call.1} parent=39 // pred_check_branch
          %501 = sbr.rel (%p499) target = $region68
        $region67: #{tpu_custom_call.1} parent=39 // pred_region
          %v502 = vld [vmem:[%s335] sm:$0xff]
          %v503 = vld [vmem:[%s335 + $0x8] sm:$0xff]
          %v504 = vld [vmem:[%s335 + $0x10] sm:$0xff]
          %v505 = vld [vmem:[%s335 + $0x18] sm:$0xff]
          %v506 = vld [vmem:[%s335 + $0x20] sm:$0xff]
          %v507 = vld [vmem:[%s335 + $0x28] sm:$0xff]
          %v508 = vld [vmem:[%s335 + $0x30] sm:$0xff]
          %v509 = vld [vmem:[%s335 + $0x38] sm:$0xff]
          %v510 = vld [vmem:[%s335 + $0x40] sm:$0xff]
          %v511 = vld [vmem:[%s335 + $0x48] sm:$0xff]
          %v512 = vld [vmem:[%s335 + $0x50] sm:$0xff]
          %v513 = vld [vmem:[%s335 + $0x58] sm:$0xff]
          %v514 = vld [vmem:[%s335 + $0x60] sm:$0xff]
          %v515 = vld [vmem:[%s335 + $0x68] sm:$0xff]
          %v516 = vld [vmem:[%s335 + $0x70] sm:$0xff]
          %v517 = vld [vmem:[%s335 + $0x78] sm:$0xff]
          %v518 = vld [vmem:[%s325] sm:$0xff]
          %v519 = vld [vmem:[%s325 + $0x8] sm:$0xff]
          %v520 = vld [vmem:[#allocation2] sm:$0xff]
          %v521 = vld [vmem:[#allocation2 + $0x8] sm:$0xff]
          %522 = vmatpush.msra.mxu0 %v517
          %523 = vmatpush.msra.mxu0 %v516
          %524 = vmatpush.msra.mxu0 %v515
          %525 = vmatpush.msra.mxu0 %v514
          %526 = vmatpush.msra.mxu0 %v513
          %527 = vmatpush.msra.mxu0 %v512
          %528 = vmatpush.msra.mxu0 %v511
          %529 = vmatpush.msra.mxu0 %v510
          %530 = vmatpush.msra.mxu0 %v509
          %531 = vmatpush.msra.mxu0 %v508
          %532 = vmatpush.msra.mxu0 %v507
          %533 = vmatpush.msra.mxu0 %v506
          %534 = vmatpush.msra.mxu0 %v505
          %535 = vmatpush.msra.mxu0 %v504
          %536 = vmatpush.msra.mxu0 %v503
          %537 = vmatpush.msra.mxu0 %v502
          %538 = vmatmul.f32.gmra.mxu0 %v520
          %v539 = vpop.f32.mrf.mxu0
          %v540 = vadd.f32 0.0, %v539
          %541 = vmatmul.f32.gmra.mxu0 %v521
          %v542 = vpop.f32.mrf.mxu0
          %v543 = vadd.f32 0.0, %v542
          %544 = vdwg.mxu0
          %vm545 = vcmask 130048
          %v547 = vsel %vm545, %v518, 0
          %v550 = vsel %vm545, %v519, 0
          %552 = vmatpush.msra.mxu0 0.0
          %553 = vmatpush.msra.mxu0 0.0
          %554 = vmatpush.msra.mxu0 0.0
          %555 = vmatpush.msra.mxu0 0.0
          %556 = vmatpush.msra.mxu0 0.0
          %557 = vmatpush.msra.mxu0 0.0
          %558 = vmatpush.msra.mxu0 0.0
          %559 = vmatpush.msra.mxu0 0.0
          %560 = vmatpush.msra.mxu0 0.0
          %561 = vmatpush.msra.mxu0 0.0
          %562 = vmatpush.msra.mxu0 0.0
          %563 = vmatpush.msra.mxu0 0.0
          %564 = vmatpush.msra.mxu0 0.0
          %565 = vmatpush.msra.mxu0 0.0
          %566 = vmatpush.msra.mxu0 %v543
          %567 = vmatpush.msra.mxu0 %v540
          %568 = vmatmul.f32.gmra.mxu0 %v547
          %v569 = vpop.f32.mrf.mxu0
          %v570 = vadd.f32 0.0, %v569
          %571 = vmatmul.f32.gmra.mxu0 %v550
          %v572 = vpop.f32.mrf.mxu0
          %v573 = vadd.f32 0.0, %v572
          %574 = vdwg.mxu0
          %v575 = vld [vmem:[%s373] sm:$0xff]
          %v576 = vld [vmem:[%s373 + $0x8] sm:$0xff]
          %v577 = vmax.f32 %v575, %v570
          %v578 = vmax.f32 %v576, %v573
          %579 = vst [vmem:[%s373] sm:$0xff] %v577
          %580 = vst [vmem:[%s373 + $0x8] sm:$0xff] %v578
          %v581 = vld [vmem:[#allocation2 + $0x10] sm:$0xff]
          %v582 = vld [vmem:[#allocation2 + $0x18] sm:$0xff]
          %583 = vmatpush.msra.mxu0 %v517
          %584 = vmatpush.msra.mxu0 %v516
          %585 = vmatpush.msra.mxu0 %v515
          %586 = vmatpush.msra.mxu0 %v514
          %587 = vmatpush.msra.mxu0 %v513
          %588 = vmatpush.msra.mxu0 %v512
          %589 = vmatpush.msra.mxu0 %v511
          %590 = vmatpush.msra.mxu0 %v510
          %591 = vmatpush.msra.mxu0 %v509
          %592 = vmatpush.msra.mxu0 %v508
          %593 = vmatpush.msra.mxu0 %v507
          %594 = vmatpush.msra.mxu0 %v506
          %595 = vmatpush.msra.mxu0 %v505
          %596 = vmatpush.msra.mxu0 %v504
          %597 = vmatpush.msra.mxu0 %v503
          %598 = vmatpush.msra.mxu0 %v502
          %599 = vmatmul.f32.gmra.mxu0 %v581
          %v600 = vpop.f32.mrf.mxu0
          %v601 = vadd.f32 0.0, %v600
          %602 = vmatmul.f32.gmra.mxu0 %v582
          %v603 = vpop.f32.mrf.mxu0
          %v604 = vadd.f32 0.0, %v603
          %605 = vdwg.mxu0
          %606 = vmatpush.msra.mxu0 0.0
          %607 = vmatpush.msra.mxu0 0.0
          %608 = vmatpush.msra.mxu0 0.0
          %609 = vmatpush.msra.mxu0 0.0
          %610 = vmatpush.msra.mxu0 0.0
          %611 = vmatpush.msra.mxu0 0.0
          %612 = vmatpush.msra.mxu0 0.0
          %613 = vmatpush.msra.mxu0 0.0
          %614 = vmatpush.msra.mxu0 0.0
          %615 = vmatpush.msra.mxu0 0.0
          %616 = vmatpush.msra.mxu0 0.0
          %617 = vmatpush.msra.mxu0 0.0
          %618 = vmatpush.msra.mxu0 0.0
          %619 = vmatpush.msra.mxu0 0.0
          %620 = vmatpush.msra.mxu0 %v604
          %621 = vmatpush.msra.mxu0 %v601
          %622 = vmatmul.f32.gmra.mxu0 %v547
          %v623 = vpop.f32.mrf.mxu0
          %v624 = vadd.f32 0.0, %v623
          %625 = vmatmul.f32.gmra.mxu0 %v550
          %v626 = vpop.f32.mrf.mxu0
          %v627 = vadd.f32 0.0, %v626
          %628 = vdwg.mxu0
          %v629 = vld [vmem:[%s373 + $0x10] sm:$0xff]
          %v630 = vld [vmem:[%s373 + $0x18] sm:$0xff]
          %v631 = vmax.f32 %v629, %v624
          %v632 = vmax.f32 %v630, %v627
          %633 = vst [vmem:[%s373 + $0x10] sm:$0xff] %v631
          %634 = vst [vmem:[%s373 + $0x18] sm:$0xff] %v632
          %v635 = vld [vmem:[#allocation2 + $0x20] sm:$0xff]
          %v636 = vld [vmem:[#allocation2 + $0x28] sm:$0xff]
          %637 = vmatpush.msra.mxu0 %v517
          %638 = vmatpush.msra.mxu0 %v516
          %639 = vmatpush.msra.mxu0 %v515
          %640 = vmatpush.msra.mxu0 %v514
          %641 = vmatpush.msra.mxu0 %v513
          %642 = vmatpush.msra.mxu0 %v512
          %643 = vmatpush.msra.mxu0 %v511
          %644 = vmatpush.msra.mxu0 %v510
          %645 = vmatpush.msra.mxu0 %v509
          %646 = vmatpush.msra.mxu0 %v508
          %647 = vmatpush.msra.mxu0 %v507
          %648 = vmatpush.msra.mxu0 %v506
          %649 = vmatpush.msra.mxu0 %v505
          %650 = vmatpush.msra.mxu0 %v504
          %651 = vmatpush.msra.mxu0 %v503
          %652 = vmatpush.msra.mxu0 %v502
          %653 = vmatmul.f32.gmra.mxu0 %v635
          %v654 = vpop.f32.mrf.mxu0
          %v655 = vadd.f32 0.0, %v654
          %656 = vmatmul.f32.gmra.mxu0 %v636
          %v657 = vpop.f32.mrf.mxu0
          %v658 = vadd.f32 0.0, %v657
          %659 = vdwg.mxu0
          %660 = vmatpush.msra.mxu0 0.0
          %661 = vmatpush.msra.mxu0 0.0
          %662 = vmatpush.msra.mxu0 0.0
          %663 = vmatpush.msra.mxu0 0.0
          %664 = vmatpush.msra.mxu0 0.0
          %665 = vmatpush.msra.mxu0 0.0
          %666 = vmatpush.msra.mxu0 0.0
          %667 = vmatpush.msra.mxu0 0.0
          %668 = vmatpush.msra.mxu0 0.0
          %669 = vmatpush.msra.mxu0 0.0
          %670 = vmatpush.msra.mxu0 0.0
          %671 = vmatpush.msra.mxu0 0.0
          %672 = vmatpush.msra.mxu0 0.0
          %673 = vmatpush.msra.mxu0 0.0
          %674 = vmatpush.msra.mxu0 %v658
          %675 = vmatpush.msra.mxu0 %v655
          %676 = vmatmul.f32.gmra.mxu0 %v547
          %v677 = vpop.f32.mrf.mxu0
          %v678 = vadd.f32 0.0, %v677
          %679 = vmatmul.f32.gmra.mxu0 %v550
          %v680 = vpop.f32.mrf.mxu0
          %v681 = vadd.f32 0.0, %v680
          %682 = vdwg.mxu0
          %v683 = vld [vmem:[%s373 + $0x20] sm:$0xff]
          %v684 = vld [vmem:[%s373 + $0x28] sm:$0xff]
          %v685 = vmax.f32 %v683, %v678
          %v686 = vmax.f32 %v684, %v681
          %687 = vst [vmem:[%s373 + $0x20] sm:$0xff] %v685
          %688 = vst [vmem:[%s373 + $0x28] sm:$0xff] %v686
        $region68: #{tpu_custom_call.1} parent=39 // pred_fallthru
          _
        %s689 = sand.u32 %s176, 1
        %s690 = scalar_lea.sflag [#allocation5], %s689
        %s691 = sand.u32 %s176, 1
        %s692 = smul.addr %s691, 48
        %s693 = scalar_lea.vmem [#allocation13], %s692
        // Predicated region
        $region69: #{tpu_custom_call.1} parent=39 // pred_check
          %p694 = pneg %p186
        $region70: #{tpu_custom_call.1} parent=39 // pred_check_branch
          %696 = sbr.rel (%p694) target = $region72
        $region71: #{tpu_custom_call.1} parent=39 // pred_region
          %s697 = smul.u32 6, %s33
          %699 = vsyncadd %s690, 0
          %s700 = smul.addr %s32, 6
          %s701 = sadd.s32 %s697, %s700
          %s702 = smul.addr %s701, 8
          %s703 = scalar_lea.hbm %s5, %s702
          %s704 = sshll.u32 %s693, 4
          %s705 = int_to_ptr.vmem [resolvable:$true] %s704
          %s706 = sshll.u32 %s703, 4
          %s707 = int_to_ptr.hbm [resolvable:$true] %s706
          %712 = dma.vmem_to_hbm [thread:$0]  %s705, 768, %s707, %s690, 128, 128, 8
        $region72: #{tpu_custom_call.1} parent=39 // pred_fallthru
          _
      $region40: #{tpu_custom_call.1} parent=5 // pred_fallthru
        _
      %p713 = scmp.le.s32.totalorder 2, %s22
      // Predicated region
      $region73: #{tpu_custom_call.1} parent=5 // pred_check
        %p714 = pneg %p713
      $region74: #{tpu_custom_call.1} parent=5 // pred_check_branch
        %716 = sbr.rel (%p714) target = $region76
      $region75: #{tpu_custom_call.1} parent=5 // pred_region
        %s717 = ssub.s32 %s22, 2
        // Predicated region
        $region77: #{tpu_custom_call.1} parent=75 // pred_check
          %p718 = pneg %p192
        $region78: #{tpu_custom_call.1} parent=75 // pred_check_branch
          %720 = sbr.rel (%p718) target = $region80
        $region79: #{tpu_custom_call.1} parent=75 // pred_region
          %s721 = sand.u32 %s177, 1
          %s722 = scalar_lea.sflag [#allocation5], %s721
          %s723 = sand.u32 %s177, 1
          %s724 = smul.addr %s723, 48
          %s725 = scalar_lea.vmem [#allocation13], %s724
          %727 = dma.done %s722, 768
        $region80: #{tpu_custom_call.1} parent=75 // pred_fallthru
          _
      $region76: #{tpu_custom_call.1} parent=5 // pred_fallthru
        _
    $region6: #{tpu_custom_call.1} parent=1 // loop_footer
      %s26 = sadd.s32 1, %s22
    $region7: #{tpu_custom_call.1} parent=1 // loop_footer_branch
      %21 = sbr.rel target = $region3
    $region8: #{tpu_custom_call.1} parent=1 // loop_exit
      _
    %728 = vsyncpa [#allocation4], 1
    %s729 = scalar_lea.sflag [#allocation4], 1
    %730 = vsyncpa %s729, 1
    %731 = vsyncpa [#allocation11], 1
    %s732 = scalar_lea.sflag [#allocation11], 1
    %733 = vsyncpa %s732, 1
    %734 = vsyncpa [#allocation5], 1
    %s735 = scalar_lea.sflag [#allocation5], 1
    %736 = vsyncpa %s735, 1
    %737 = vsyncpa [#allocation6], 1
    %s738 = scalar_lea.sflag [#allocation6], 1
    %739 = vsyncpa %s738, 1
    %740 = vsyncpa [#allocation8], 1

</llo_original>
